<compile_context>
chip_gen: v5e
topology: v5e:2x2
jax: 0.10.0
libtpu: 0.0.40
codegen_flags: <defaults>
</compile_context>

<pallas_src>
import functools

import jax
import jax.numpy as jnp
from jax.experimental import pallas as pl
from jax.experimental.pallas import tpu as pltpu

LRELU_SLOPE = 0.1


def get_padding(kernel_size, dilation=1):
    return int((kernel_size * dilation - dilation) / 2)


def _round_up(x, m):
    return (x + m - 1) // m * m


# ---------------------------------------------------------------------------
# Pallas kernel: tiled GEMM + bias + leaky_relu
# ---------------------------------------------------------------------------
def _gemm_bias_act_kernel(a_ref, b_ref, bias_ref, o_ref, acc_ref, *, apply_lrelu):
    """a_ref: (tm, tk) bf16, b_ref: (tk, tn) bf16, bias_ref: (1, tn) f32,
    o_ref: (tm, tn) f32, acc_ref: (tm, tn) f32 VMEM scratch (accumulates over K axis)."""
    k = pl.program_id(2)

    @pl.when(k == 0)
    def _():
        acc_ref[...] = jnp.zeros_like(acc_ref)

    acc_ref[...] += jnp.dot(a_ref[...], b_ref[...],
                            preferred_element_type=jnp.float32)

    @pl.when(k == pl.num_programs(2) - 1)
    def _():
        r = acc_ref[...] + bias_ref[...]
        if apply_lrelu:
            r = jnp.where(r > 0, r, LRELU_SLOPE * r)
        o_ref[...] = r.astype(o_ref.dtype)


def _pick_tk(kc):
    """Contraction tile: single block when small, else a 128-multiple divisor."""
    if kc <= 1024:
        return kc
    for cand in (512, 256, 128):
        if kc % cand == 0:
            return cand
    return kc  # irregular large K: fall back to a single block


def _gemm_bias_act(a, w, bias, *, apply_lrelu):
    """a: (M, Kc), w: (Kc, Cn), bias: (1, Cn)  ->  (M, Cn) f32.

    Pads M to a multiple of 8/tm, Kc and Cn to multiples of 128, casts the matmul
    operands to bf16 (f32 accumulation in VMEM scratch), and slices the padding off.
    """
    m, kc = a.shape
    kc_w, cn = w.shape
    assert kc == kc_w

    # --- pad contraction dim to a multiple of 128 (zeros contribute nothing) ---
    kc_pad = _round_up(kc, 128)
    if kc_pad != kc:
        a = jnp.pad(a, ((0, 0), (0, kc_pad - kc)))
        w = jnp.pad(w, ((0, kc_pad - kc), (0, 0)))

    # --- pad output-channel dim to a multiple of 128 (lane-dense stores) ---
    cn_pad = _round_up(cn, 128)
    tn = min(256, cn_pad)
    cn_pad = _round_up(cn_pad, tn)
    if cn_pad != cn:
        w = jnp.pad(w, ((0, 0), (0, cn_pad - cn)))
        bias = jnp.pad(bias, ((0, 0), (0, cn_pad - cn)))

    # --- pad M to a multiple of tm (tm multiple of 8, capped at 256) ---
    tm = min(256, _round_up(m, 8))
    m_pad = _round_up(m, tm)
    if m_pad != m:
        a = jnp.pad(a, ((0, m_pad - m), (0, 0)))

    tk = _pick_tk(kc_pad)
    grid = (m_pad // tm, cn_pad // tn, kc_pad // tk)

    kernel = functools.partial(_gemm_bias_act_kernel, apply_lrelu=apply_lrelu)
    out = pl.pallas_call(
        kernel,
        out_shape=jax.ShapeDtypeStruct((m_pad, cn_pad), jnp.float32),
        grid=grid,
        in_specs=[
            pl.BlockSpec((tm, tk), lambda i, j, k: (i, k)),
            pl.BlockSpec((tk, tn), lambda i, j, k: (k, j)),
            pl.BlockSpec((1, tn), lambda i, j, k: (0, j)),
        ],
        out_specs=pl.BlockSpec((tm, tn), lambda i, j, k: (i, j)),
        scratch_shapes=[pltpu.VMEM((tm, tn), jnp.float32)],
        compiler_params=pltpu.CompilerParams(
            dimension_semantics=("parallel", "parallel", "arbitrary")),
    )(a.astype(jnp.bfloat16), w.astype(jnp.bfloat16), bias.astype(jnp.float32))
    return out[:m, :cn]


# ---------------------------------------------------------------------------
# Conv layer = im2col (plain JAX glue) + Pallas GEMM
# ---------------------------------------------------------------------------
def _im2col(x, ksize, stride, pad):
    """x: (N, H, C) -> (N*H_out, ksize*C); column order is (tap, channel) so it
    matches w.reshape(ksize*C_in, C_out)."""
    n, h, c = x.shape
    h_out = (h + 2 * pad - ksize) // stride + 1
    x_pad = jnp.pad(x, ((0, 0), (pad, pad), (0, 0)))
    limit = (h_out - 1) * stride + 1
    cols = [x_pad[:, k:k + limit:stride, :] for k in range(ksize)]
    a = jnp.stack(cols, axis=2).reshape(n * h_out, ksize * c)
    return a, h_out


def conv_layer(x, w, b, *, stride, pad, apply_lrelu):
    """x: (N, H, C_in) f32, w: (K, C_in, C_out), b: (1, C_out) -> (N, H_out, C_out) f32."""
    n, _, c_in = x.shape
    ksize, _, c_out = w.shape
    a, h_out = _im2col(x, ksize, stride, pad)
    out = _gemm_bias_act(a, w.reshape(ksize * c_in, c_out), b,
                         apply_lrelu=apply_lrelu)
    return out.reshape(n, h_out, c_out)


def conv_layer_ref(x, w, b, *, stride, pad, apply_lrelu):
    """Pure-JAX reference (same im2col, plain f32 matmul) for a sanity check."""
    n, _, c_in = x.shape
    ksize, _, c_out = w.shape
    a, h_out = _im2col(x, ksize, stride, pad)
    out = a.astype(jnp.float32) @ w.reshape(ksize * c_in, c_out).astype(jnp.float32)
    out = out + b.astype(jnp.float32)
    if apply_lrelu:
        out = jnp.where(out > 0, out, LRELU_SLOPE * out)
    return out.reshape(n, h_out, c_out)


# ---------------------------------------------------------------------------
# Parameters and full forward pass
# ---------------------------------------------------------------------------
def init_params(key, kernel_size=5, c_in=1):
    """Deterministic synthetic parameters with the shapes implied by __init__.
    weight_norm at init is an identity reparameterization, so plain weights are used.
    Weights are stored in bf16 (matmul operand precision); biases stay f32."""
    chans = [c_in, 32, 128, 512, 1024, 1024]
    params = {"convs": [], "conv_post": None}
    for i in range(5):
        key, k1, k2 = jax.random.split(key, 3)
        w = (jax.random.normal(k1, (kernel_size, chans[i], chans[i + 1]), jnp.float32)
             * 0.05).astype(jnp.bfloat16)
        b = jax.random.normal(k2, (1, chans[i + 1]), jnp.float32) * 0.05
        params["convs"].append((w, b))
    key, k1, k2 = jax.random.split(key, 3)
    w = (jax.random.normal(k1, (3, 1024, 1), jnp.float32) * 0.05).astype(jnp.bfloat16)
    b = jax.random.normal(k2, (1, 1), jnp.float32) * 0.05
    params["conv_post"] = (w, b)
    return params


def discriminator_p_forward(x, params, period, kernel_size=5, stride=3,
                            layer_fn=conv_layer):
    """x: (b, c, t) like the PyTorch module (use_cond=False, mel unused).
    Returns (flattened logits (b, -1), fmap list in NCHW = (b, C, H, period))."""
    # TODO(synk): use_cond ConvTranspose1d conditioning branch not implemented
    # (module default use_cond=False).
    b, c, t = x.shape
    if t % period != 0:
        n_pad = period - t % period
        # NOTE: reflect pad requires n_pad < t (true for realistic audio lengths).
        x = jnp.pad(x, ((0, 0), (0, 0), (0, n_pad)), mode="reflect")
        t = t + n_pad
    h = t // period
    # NCHW view (b, c, h, period) -> channels-last (b*period, h, c)
    xl = jnp.transpose(x.reshape(b, c, h, period), (0, 3, 2, 1)).reshape(b * period, h, c)

    def to_nchw(y):
        n, hh, cc = y.shape
        return jnp.transpose(y.reshape(b, period, hh, cc), (0, 3, 2, 1))

    fmap = []
    conv_strides = (stride, stride, stride, stride, 1)
    pad = get_padding(kernel_size, 1)
    for (w, bias), s in zip(params["convs"], conv_strides):
        xl = layer_fn(xl, w, bias, stride=s, pad=pad, apply_lrelu=True)
        fmap.append(to_nchw(xl))
    w, bias = params["conv_post"]
    xl = layer_fn(xl, w, bias, stride=1, pad=1, apply_lrelu=False)
    fmap.append(to_nchw(xl))
    out = to_nchw(xl).reshape(b, -1)  # torch.flatten(x, 1, -1)
    return out, fmap


if __name__ == "__main__":
    key = jax.random.PRNGKey(0)
    kx, kp = jax.random.split(key)
    batch, c_in, t = 2, 1, 61   # t not divisible by period -> exercises reflect pad
    period = 2
    x = jax.random.normal(kx, (batch, c_in, t), jnp.float32)
    params = init_params(kp)

    out, fmap = discriminator_p_forward(x, params, period=period)
    jax.block_until_ready(out)
    for f in fmap:
        jax.block_until_ready(f)

    # Sanity check against a pure-JAX f32 reference (loose tol: kernel uses bf16 operands).
    out_ref, fmap_ref = discriminator_p_forward(x, params, period=period,
                                                layer_fn=conv_layer_ref)
    if not jnp.allclose(out, out_ref, atol=5e-2, rtol=5e-2):
        raise RuntimeError("Pallas output diverged from reference")
    for a, r in zip(fmap, fmap_ref):
        if not jnp.allclose(a, r, atol=5e-2, rtol=5e-2):
            raise RuntimeError("Pallas fmap diverged from reference")

    print("KERNEL_OK")
</pallas_src>

<mosaic_0001>
module attributes {stable_mosaic.version = 11 : i64} {
  func.func @_gemm_bias_act_kernel(%arg0: i32, %arg1: i32, %arg2: i32, %arg3: memref<48x128xbf16, #tpu.memory_space<vmem>>, %arg4: memref<128x128xbf16, #tpu.memory_space<vmem>>, %arg5: memref<1x128xf32, #tpu.memory_space<vmem>>, %arg6: memref<48x128xf32, #tpu.memory_space<vmem>>, %arg7: memref<48x128xf32, #tpu.memory_space<vmem>>) attributes {dimension_semantics = [#tpu.dimension_semantics<parallel>, #tpu.dimension_semantics<parallel>, #tpu.dimension_semantics<arbitrary>], iteration_bounds = array<i64: 1, 1, 1>, scalar_prefetch = 0 : i64, scratch_operands = 1 : i64, tpu.core_type = #tpu.core_type<tc>, window_params = [{transform_indices = @transform_0, window_bounds = array<i64: 48, 128>}, {transform_indices = @transform_1, window_bounds = array<i64: 128, 128>}, {transform_indices = @transform_2, window_bounds = array<i64: 1, 128>}, {transform_indices = @transform_3, window_bounds = array<i64: 48, 128>}]} {
    %c0_i32 = arith.constant 0 : i32
    %0 = arith.cmpi eq, %arg2, %c0_i32 : i32
    %1 = arith.extui %0 : i1 to i32
    %c0_i32_0 = arith.constant 0 : i32
    %2 = arith.cmpi ne, %1, %c0_i32_0 : i32
    scf.if %2 {
      %cst_10 = arith.constant 0.000000e+00 : f32
      %12 = vector.broadcast %cst_10 : f32 to vector<48x128xf32>
      %c0_11 = arith.constant 0 : index
      %c0_12 = arith.constant 0 : index
      %13 = vector.load %arg7[%c0_11, %c0_12] : memref<48x128xf32, #tpu.memory_space<vmem>>, vector<48x128xf32>
      tpu.vector_store %arg7[%c0_11, %c0_12], %12 {strides = array<i32>} : memref<48x128xf32, #tpu.memory_space<vmem>>, vector<48x128xf32>,
    } else {
    }
    %c0 = arith.constant 0 : index
    %c0_1 = arith.constant 0 : index
    %3 = vector.load %arg7[%c0, %c0_1] : memref<48x128xf32, #tpu.memory_space<vmem>>, vector<48x128xf32>
    %c0_2 = arith.constant 0 : index
    %c0_3 = arith.constant 0 : index
    %4 = vector.load %arg3[%c0_2, %c0_3] : memref<48x128xbf16, #tpu.memory_space<vmem>>, vector<48x128xbf16>
    %c0_4 = arith.constant 0 : index
    %c0_5 = arith.constant 0 : index
    %5 = vector.load %arg4[%c0_4, %c0_5] : memref<128x128xbf16, #tpu.memory_space<vmem>>, vector<128x128xbf16>
    %cst = arith.constant dense<0.000000e+00> : vector<48x128xf32>
    %6 = tpu.matmul %4, %5, %cst {dimension_numbers = #tpu.dot_dimension_numbers<[1], [0], [0], [1], [0, 0, 1, 1], [], []>} : vector<48x128xbf16>, vector<128x128xbf16>, vector<48x128xf32> -> vector<48x128xf32>
    %7 = arith.addf %3, %6 : vector<48x128xf32>
    %c0_6 = arith.constant 0 : index
    %c0_7 = arith.constant 0 : index
    %8 = vector.load %arg7[%c0_6, %c0_7] : memref<48x128xf32, #tpu.memory_space<vmem>>, vector<48x128xf32>
    tpu.vector_store %arg7[%c0_6, %c0_7], %7 {strides = array<i32>} : memref<48x128xf32, #tpu.memory_space<vmem>>, vector<48x128xf32>,
    %c0_i32_8 = arith.constant 0 : i32
    %9 = arith.cmpi eq, %arg2, %c0_i32_8 : i32
    %10 = arith.extui %9 : i1 to i32
    %c0_i32_9 = arith.constant 0 : i32
    %11 = arith.cmpi ne, %10, %c0_i32_9 : i32
    scf.if %11 {
      %c0_10 = arith.constant 0 : index
      %c0_11 = arith.constant 0 : index
      %12 = vector.load %arg7[%c0_10, %c0_11] : memref<48x128xf32, #tpu.memory_space<vmem>>, vector<48x128xf32>
      %c0_12 = arith.constant 0 : index
      %c0_13 = arith.constant 0 : index
      %13 = vector.load %arg5[%c0_12, %c0_13] : memref<1x128xf32, #tpu.memory_space<vmem>>, vector<1x128xf32>
      %14 = vector.broadcast %13 : vector<1x128xf32> to vector<48x128xf32>
      %15 = arith.addf %12, %14 : vector<48x128xf32>
      %cst_14 = arith.constant 0.000000e+00 : f32
      %16 = vector.broadcast %cst_14 : f32 to vector<48x128xf32>
      %17 = arith.cmpf ogt, %15, %16 : vector<48x128xf32>
      %cst_15 = arith.constant 1.000000e-01 : f32
      %18 = vector.broadcast %cst_15 : f32 to vector<48x128xf32>
      %19 = arith.mulf %18, %15 : vector<48x128xf32>
      %20 = arith.select %17, %15, %19 : vector<48x128xi1>, vector<48x128xf32>
      %c0_16 = arith.constant 0 : index
      %c0_17 = arith.constant 0 : index
      %21 = vector.load %arg6[%c0_16, %c0_17] : memref<48x128xf32, #tpu.memory_space<vmem>>, vector<48x128xf32>
      tpu.vector_store %arg6[%c0_16, %c0_17], %20 {strides = array<i32>} : memref<48x128xf32, #tpu.memory_space<vmem>>, vector<48x128xf32>,
    } else {
    }
    return
  }
  func.func @transform_0(%arg0: i32, %arg1: i32, %arg2: i32) -> (i32, i32) {
    %c0_i32 = arith.constant 0 : i32
    return %arg0, %arg2 : i32, i32
  }
  func.func @transform_1(%arg0: i32, %arg1: i32, %arg2: i32) -> (i32, i32) {
    %c0_i32 = arith.constant 0 : i32
    return %arg2, %arg1 : i32, i32
  }
  func.func @transform_2(%arg0: i32, %arg1: i32, %arg2: i32) -> (i32, i32) {
    %c0_i32 = arith.constant 0 : i32
    %c0_i32_0 = arith.constant 0 : i32
    return %c0_i32, %arg1 : i32, i32
  }
  func.func @transform_3(%arg0: i32, %arg1: i32, %arg2: i32) -> (i32, i32) {
    %c0_i32 = arith.constant 0 : i32
    return %arg0, %arg1 : i32, i32
  }
}

</mosaic_0001>

<llo_original>
// kernel: tpu_custom_call.1
$region0: #{tpu_custom_call.1}
  #allocation0 [shape = 'u32[]', space=smem, size = 0x4, offset = 0x4, fixed_abs, tag = 'smem constant byte address 0x4 - core index']
  #allocation1 [shape = 'u32[72,128]{1,0:T(1,128)}', space=vmem, size = 0x9000, scoped, tag = 'internal scratch']
  #allocation2 [shape = 'f32[48,128]{1,0:T(8,128)}', space=vmem, size = 0x6000, scoped, tag = 'scratch operand']
  %s0 = inlined_call_operand.hbm [shape: bf16[48,128], index: 0, kind: input, shape index: {}]
  %s1 = inlined_call_operand.hbm [shape: bf16[128,128], index: 1, kind: input, shape index: {}]
  %s2 = inlined_call_operand.vmem [shape: f32[1,128], index: 2, kind: input, shape index: {}]
  %s3 = inlined_call_operand.hbm [shape: f32[48,128], index: 3, kind: output, shape index: {}]
  %s4 = sld [smem:[#allocation0]]
  $region38: #{tpu_custom_call.1} parent=0
    _
  %s6 = ssub.s32 1, %s4
  %s7 = scalar_select 0, %s6, %s4
  $region1: #{tpu_custom_call.1} parent=0
    #allocation3 [shape = 'u8[12288]{0}', space=vmem, size = 0x3000, scoped, tag = 'input window, operand 0, single buffered']
    #allocation4 [shape = 's32[1]{0}', space=sflag, size = 0x4, scoped, tag = 'scoped memory for tpu_custom_call.1']
    #allocation5 [shape = 's32[1]{0}', space=sflag, size = 0x4, scoped, tag = 'scoped memory for tpu_custom_call.1']
    #allocation6 [shape = 'u8[32768]{0}', space=vmem, size = 0x8000, scoped, tag = 'input window, operand 1, single buffered']
    #allocation7 [shape = 's32[1]{0}', space=sflag, size = 0x4, scoped, tag = 'scoped memory for tpu_custom_call.1']
    #allocation8 [shape = 'u8[24576]{0}', space=vmem, size = 0x6000, scoped, tag = 'output window, operand 0, single buffered']
    %8 = vsyncpa [#allocation4], 0
    %9 = vsyncpa [#allocation7], 0
    %10 = vsyncpa [#allocation5], 0
    // Predicated region
    $region2: #{tpu_custom_call.1} parent=1 // pred_check
      _
    $region3: #{tpu_custom_call.1} parent=1 // pred_check_branch
      %12 = sbr.rel (0) target = $region5
    $region4: #{tpu_custom_call.1} parent=1 // pred_region
      %14 = vsyncadd [#allocation4], 0
      %s15 = sshll.u32 %s0, 4
      %s16 = int_to_ptr.hbm [resolvable:$true] %s15
      %s17 = sshll.u32 [#allocation3], 4
      %s18 = int_to_ptr.vmem [resolvable:$true] %s17
      %23 = dma.hbm_to_vmem [thread:$0]  %s16, 384, %s18, [#allocation4], 64, 64, 4
    $region5: #{tpu_custom_call.1} parent=1 // pred_fallthru
      _
    // Predicated region
    $region6: #{tpu_custom_call.1} parent=1 // pred_check
      _
    $region7: #{tpu_custom_call.1} parent=1 // pred_check_branch
      %25 = sbr.rel (0) target = $region9
    $region8: #{tpu_custom_call.1} parent=1 // pred_region
      %27 = vsyncadd [#allocation7], 0
      %s28 = sshll.u32 %s1, 4
      %s29 = int_to_ptr.hbm [resolvable:$true] %s28
      %s30 = sshll.u32 [#allocation6], 4
      %s31 = int_to_ptr.vmem [resolvable:$true] %s30
      %36 = dma.hbm_to_vmem [thread:$0]  %s29, 1024, %s31, [#allocation7], 64, 64, 4
    $region9: #{tpu_custom_call.1} parent=1 // pred_fallthru
      _
    // Predicated region
    $region10: #{tpu_custom_call.1} parent=1 // pred_check
      _
    $region11: #{tpu_custom_call.1} parent=1 // pred_check_branch
      %38 = sbr.rel (0) target = $region13
    $region12: #{tpu_custom_call.1} parent=1 // pred_region
      _
    $region13: #{tpu_custom_call.1} parent=1 // pred_fallthru
      _
    // Predicated region
    $region14: #{tpu_custom_call.1} parent=1 // pred_check
      _
    $region15: #{tpu_custom_call.1} parent=1 // pred_check_branch
      %40 = sbr.rel (0) target = $region17
    $region16: #{tpu_custom_call.1} parent=1 // pred_region
      %42 = dma.done [#allocation4], 384
    $region17: #{tpu_custom_call.1} parent=1 // pred_fallthru
      _
    // Predicated region
    $region18: #{tpu_custom_call.1} parent=1 // pred_check
      _
    $region19: #{tpu_custom_call.1} parent=1 // pred_check_branch
      %44 = sbr.rel (0) target = $region21
    $region20: #{tpu_custom_call.1} parent=1 // pred_region
      %46 = dma.done [#allocation7], 1024
    $region21: #{tpu_custom_call.1} parent=1 // pred_fallthru
      _
    %p47 = scmp.eq.s32.totalorder 0, 0
    // Predicated region
    $region22: #{tpu_custom_call.1} parent=1 // pred_check
      %p48 = pneg %p47
    $region23: #{tpu_custom_call.1} parent=1 // pred_check_branch
      %50 = sbr.rel (%p48) target = $region25
    $region24: #{tpu_custom_call.1} parent=1 // pred_region
      %51 = vst [vmem:[#allocation2] sm:$0xff] 0.0
      %52 = vst [vmem:[#allocation2 + $0x8] sm:$0xff] 0.0
      %53 = vst [vmem:[#allocation2 + $0x10] sm:$0xff] 0.0
      %54 = vst [vmem:[#allocation2 + $0x18] sm:$0xff] 0.0
      %55 = vst [vmem:[#allocation2 + $0x20] sm:$0xff] 0.0
      %56 = vst [vmem:[#allocation2 + $0x28] sm:$0xff] 0.0
    $region25: #{tpu_custom_call.1} parent=1 // pred_fallthru
      _
    %v57 = vld [vmem:[#allocation2] sm:$0xff]
    %v58 = vld [vmem:[#allocation2 + $0x8] sm:$0xff]
    %v59 = vld [vmem:[#allocation2 + $0x10] sm:$0xff]
    %v60 = vld [vmem:[#allocation2 + $0x18] sm:$0xff]
    %v61 = vld [vmem:[#allocation2 + $0x20] sm:$0xff]
    %v62 = vld [vmem:[#allocation2 + $0x28] sm:$0xff]
    %v63 = vld [vmem:[#allocation3] sm:$0xf]
    %v64 = vld [vmem:[#allocation3 + $0x4] sm:$0xf]
    %v65 = vld [vmem:[#allocation3 + $0x8] sm:$0xf]
    %v66 = vld [vmem:[#allocation3 + $0xc] sm:$0xf]
    %v67 = vld [vmem:[#allocation3 + $0x10] sm:$0xf]
    %v68 = vld [vmem:[#allocation3 + $0x14] sm:$0xf]
    %v69 = vld [vmem:[#allocation6] sm:$0xf]
    %v70 = vld [vmem:[#allocation6 + $0x4] sm:$0xf]
    %v71 = vld [vmem:[#allocation6 + $0x8] sm:$0xf]
    %v72 = vld [vmem:[#allocation6 + $0xc] sm:$0xf]
    %v73 = vld [vmem:[#allocation6 + $0x10] sm:$0xf]
    %v74 = vld [vmem:[#allocation6 + $0x14] sm:$0xf]
    %v75 = vld [vmem:[#allocation6 + $0x18] sm:$0xf]
    %v76 = vld [vmem:[#allocation6 + $0x1c] sm:$0xf]
    %v77 = vld [vmem:[#allocation6 + $0x20] sm:$0xf]
    %v78 = vld [vmem:[#allocation6 + $0x24] sm:$0xf]
    %v79 = vld [vmem:[#allocation6 + $0x28] sm:$0xf]
    %v80 = vld [vmem:[#allocation6 + $0x2c] sm:$0xf]
    %v81 = vld [vmem:[#allocation6 + $0x30] sm:$0xf]
    %v82 = vld [vmem:[#allocation6 + $0x34] sm:$0xf]
    %v83 = vld [vmem:[#allocation6 + $0x38] sm:$0xf]
    %v84 = vld [vmem:[#allocation6 + $0x3c] sm:$0xf]
    %v91 = vunpack.c.l.b16 %v63
    %v92 = vunpack.c.l.b16 %v64
    %v93 = vunpack.c.l.b16 %v65
    %v94 = vunpack.c.l.b16 %v66
    %v95 = vunpack.c.l.b16 %v67
    %v96 = vunpack.c.l.b16 %v68
    %v97 = vpack.c.b16 %v92, %v91
    %v98 = vpack.c.b16 %v94, %v93
    %v99 = vpack.c.b16 %v96, %v95
    %v119 = vunpack.c.l.b16 %v69
    %v120 = vunpack.c.l.b16 %v70
    %v121 = vunpack.c.l.b16 %v71
    %v122 = vunpack.c.l.b16 %v72
    %v123 = vunpack.c.l.b16 %v73
    %v124 = vunpack.c.l.b16 %v74
    %v125 = vunpack.c.l.b16 %v75
    %v126 = vunpack.c.l.b16 %v76
    %v127 = vunpack.c.l.b16 %v77
    %v128 = vunpack.c.l.b16 %v78
    %v129 = vunpack.c.l.b16 %v79
    %v130 = vunpack.c.l.b16 %v80
    %v131 = vunpack.c.l.b16 %v81
    %v132 = vunpack.c.l.b16 %v82
    %v133 = vunpack.c.l.b16 %v83
    %v134 = vunpack.c.l.b16 %v84
    %v135 = vpack.c.b16 %v120, %v119
    %v136 = vpack.c.b16 %v122, %v121
    %v137 = vpack.c.b16 %v124, %v123
    %v138 = vpack.c.b16 %v126, %v125
    %v139 = vpack.c.b16 %v128, %v127
    %v140 = vpack.c.b16 %v130, %v129
    %v141 = vpack.c.b16 %v132, %v131
    %v142 = vpack.c.b16 %v134, %v133
    %151 = vmatpush.bf16.msra.mxu0 %v142
    %152 = vmatpush.bf16.msra.mxu0 %v141
    %153 = vmatpush.bf16.msra.mxu0 %v140
    %154 = vmatpush.bf16.msra.mxu0 %v139
    %155 = vmatpush.bf16.msra.mxu0 %v138
    %156 = vmatpush.bf16.msra.mxu0 %v137
    %157 = vmatpush.bf16.msra.mxu0 %v136
    %158 = vmatpush.bf16.msra.mxu0 %v135
    %159 = vmatmul.bf16.gmra.mxu0 %v97
    %v160 = vpop.f32.mrf.mxu0
    %v161 = vadd.f32 0.0, %v160
    %v162 = vpop.f32.mrf.mxu0
    %v163 = vadd.f32 0.0, %v162
    %164 = vmatmul.bf16.gmra.mxu0 %v98
    %v165 = vpop.f32.mrf.mxu0
    %v166 = vadd.f32 0.0, %v165
    %v167 = vpop.f32.mrf.mxu0
    %v168 = vadd.f32 0.0, %v167
    %169 = vmatmul.bf16.gmra.mxu0 %v99
    %v170 = vpop.f32.mrf.mxu0
    %v171 = vadd.f32 0.0, %v170
    %v172 = vpop.f32.mrf.mxu0
    %v173 = vadd.f32 0.0, %v172
    %174 = vdwg.mxu0
    %v175 = vadd.f32 %v57, %v161
    %v176 = vadd.f32 %v58, %v163
    %v177 = vadd.f32 %v59, %v166
    %v178 = vadd.f32 %v60, %v168
    %v179 = vadd.f32 %v61, %v171
    %v180 = vadd.f32 %v62, %v173
    %181 = vst [vmem:[#allocation2] sm:$0xff] %v175
    %182 = vst [vmem:[#allocation2 + $0x8] sm:$0xff] %v176
    %183 = vst [vmem:[#allocation2 + $0x10] sm:$0xff] %v177
    %184 = vst [vmem:[#allocation2 + $0x18] sm:$0xff] %v178
    %185 = vst [vmem:[#allocation2 + $0x20] sm:$0xff] %v179
    %186 = vst [vmem:[#allocation2 + $0x28] sm:$0xff] %v180
    // Predicated region
    $region26: #{tpu_custom_call.1} parent=1 // pred_check
      %p187 = pneg %p47
    $region27: #{tpu_custom_call.1} parent=1 // pred_check_branch
      %189 = sbr.rel (%p187) target = $region29
    $region28: #{tpu_custom_call.1} parent=1 // pred_region
      %v190 = vld [vmem:[#allocation2] sm:$0xff]
      %v191 = vld [vmem:[#allocation2 + $0x8] sm:$0xff]
      %v192 = vld [vmem:[#allocation2 + $0x10] sm:$0xff]
      %v193 = vld [vmem:[#allocation2 + $0x18] sm:$0xff]
      %v194 = vld [vmem:[#allocation2 + $0x20] sm:$0xff]
      %v195 = vld [vmem:[#allocation2 + $0x28] sm:$0xff]
      %v196 = vld [vmem:[%s2] sm:$0x1]
      %v198 = vperm.slane %v196, 0
      %v200 = vadd.f32 %v190, %v198
      %v201 = vadd.f32 %v191, %v198
      %v202 = vadd.f32 %v192, %v198
      %v203 = vadd.f32 %v193, %v198
      %v204 = vadd.f32 %v194, %v198
      %v205 = vadd.f32 %v195, %v198
      %vm206 = vcmp.gt.f32.partialorder %v200, 0.0
      %vm207 = vcmp.gt.f32.partialorder %v201, 0.0
      %vm208 = vcmp.gt.f32.partialorder %v202, 0.0
      %vm209 = vcmp.gt.f32.partialorder %v203, 0.0
      %vm210 = vcmp.gt.f32.partialorder %v204, 0.0
      %vm211 = vcmp.gt.f32.partialorder %v205, 0.0
      %v212 = vmul.f32 %v200, 0.1
      %v213 = vmul.f32 %v201, 0.1
      %v214 = vmul.f32 %v202, 0.1
      %v215 = vmul.f32 %v203, 0.1
      %v216 = vmul.f32 %v204, 0.1
      %v217 = vmul.f32 %v205, 0.1
      %v218 = vsel %vm206, %v200, %v212
      %v219 = vsel %vm207, %v201, %v213
      %v220 = vsel %vm208, %v202, %v214
      %v221 = vsel %vm209, %v203, %v215
      %v222 = vsel %vm210, %v204, %v216
      %v223 = vsel %vm211, %v205, %v217
      %224 = vst [vmem:[#allocation8] sm:$0xff] %v218
      %225 = vst [vmem:[#allocation8 + $0x8] sm:$0xff] %v219
      %226 = vst [vmem:[#allocation8 + $0x10] sm:$0xff] %v220
      %227 = vst [vmem:[#allocation8 + $0x18] sm:$0xff] %v221
      %228 = vst [vmem:[#allocation8 + $0x20] sm:$0xff] %v222
      %229 = vst [vmem:[#allocation8 + $0x28] sm:$0xff] %v223
    $region29: #{tpu_custom_call.1} parent=1 // pred_fallthru
      _
    // Predicated region
    $region30: #{tpu_custom_call.1} parent=1 // pred_check
      _
    $region31: #{tpu_custom_call.1} parent=1 // pred_check_branch
      %231 = sbr.rel (0) target = $region33
    $region32: #{tpu_custom_call.1} parent=1 // pred_region
      %233 = vsyncadd [#allocation5], 0
      %s234 = sshll.u32 [#allocation8], 4
      %s235 = int_to_ptr.vmem [resolvable:$true] %s234
      %s236 = sshll.u32 %s3, 4
      %s237 = int_to_ptr.hbm [resolvable:$true] %s236
      %242 = dma.vmem_to_hbm [thread:$0]  %s235, 768, %s237, [#allocation5], 128, 128, 8
    $region33: #{tpu_custom_call.1} parent=1 // pred_fallthru
      _
    // Predicated region
    $region34: #{tpu_custom_call.1} parent=1 // pred_check
      _
    $region35: #{tpu_custom_call.1} parent=1 // pred_check_branch
      %244 = sbr.rel (0) target = $region37
    $region36: #{tpu_custom_call.1} parent=1 // pred_region
      %246 = dma.done [#allocation5], 768
    $region37: #{tpu_custom_call.1} parent=1 // pred_fallthru
      _
    %247 = vsyncpa [#allocation4], 1
    %248 = vsyncpa [#allocation7], 1
    %249 = vsyncpa [#allocation5], 1

</llo_original>
